<compile_context>
chip_gen: v7x
topology: tpu7x:2x2x1
jax: 0.10.0
libtpu: 0.0.40
codegen_flags: <defaults>
</compile_context>

<pallas_src>
import functools

import jax
import jax.numpy as jnp
from jax.experimental import pallas as pl
from jax.experimental.pallas import tpu as pltpu


def _round_up(x: int, m: int) -> int:
    return (x + m - 1) // m * m


def _fused_mlp_kernel(x_ref, w_ref, b_ref, o_ref, *, num_layers: int):
    # x_ref: (TN, Dmax) token tile; w_ref: (L, Dmax, Dmax); b_ref: (L, 1, Dmax).
    # All layers run back-to-back with the activation kept on-chip (VMEM/vregs).
    act = x_ref[...]  # f32 (TN, Dmax)
    for l in range(num_layers):  # static unroll; num_layers is small & fixed
        y = jnp.dot(act, w_ref[l], preferred_element_type=jnp.float32)
        y = y + b_ref[l]  # (1, Dmax) bias broadcast over rows
        if l < num_layers - 1:
            y = jnp.maximum(y, 0.0)  # ReLU on hidden layers only
        act = y
    o_ref[...] = act.astype(o_ref.dtype)


@functools.partial(jax.jit, static_argnames=("num_layers", "out_dim", "token_tile"))
def _mlp_apply(x, w_stack, b_stack, *, num_layers, out_dim, token_tile):
    lead = x.shape[:-1]
    din = x.shape[-1]
    dmax = w_stack.shape[-1]

    x2 = x.reshape(-1, din).astype(jnp.float32)
    n = x2.shape[0]

    # Token tiling: a single full tile for small N; 'token_tile'-row tiles
    # (parallel grid axis, auto double-buffered) for large N.
    if n <= token_tile:
        tn = _round_up(max(n, 8), 8)
        n_pad = tn
    else:
        tn = token_tile  # multiple of 8
        n_pad = _round_up(n, tn)
    grid_n = n_pad // tn

    # Zero-pad tokens to n_pad rows and features to the lane-dense width Dmax.
    # (Zero feature-padding + zero-padded W rows keep the math exact.)
    x_pad = jnp.zeros((n_pad, dmax), jnp.float32).at[:n, :din].set(x2)

    # Keep VMEM budget generous enough for resident weights + double-buffered
    # activation tiles (all tiny for typical QRNet MLP sizes).
    w_bytes = num_layers * dmax * dmax * 4
    tile_bytes = tn * dmax * 4
    vmem_limit = min(128 * 1024 * 1024,
                     max(32 * 1024 * 1024, 2 * w_bytes + 8 * tile_bytes))

    kernel = functools.partial(_fused_mlp_kernel, num_layers=num_layers)
    out_pad = pl.pallas_call(
        kernel,
        out_shape=jax.ShapeDtypeStruct((n_pad, dmax), jnp.float32),
        grid=(grid_n,),
        in_specs=[
            pl.BlockSpec((tn, dmax), lambda i: (i, 0)),                    # x tile
            pl.BlockSpec((num_layers, dmax, dmax), lambda i: (0, 0, 0)),   # W (resident)
            pl.BlockSpec((num_layers, 1, dmax), lambda i: (0, 0, 0)),      # b (resident)
        ],
        out_specs=pl.BlockSpec((tn, dmax), lambda i: (i, 0)),
        compiler_params=pltpu.CompilerParams(
            dimension_semantics=("parallel",),
            vmem_limit_bytes=int(vmem_limit),
        ),
    )(x_pad, w_stack, b_stack)

    return out_pad[:n, :out_dim].reshape(*lead, out_dim)


class MLP:
    """JAX/Pallas port of nets/QRNet.py::MLP (fully fused forward, f32)."""

    def __init__(self, input_dim, hidden_dim, output_dim, num_layers, key,
                 token_tile=512):
        self.num_layers = num_layers
        self.output_dim = output_dim
        self.token_tile = token_tile

        h = [hidden_dim] * (num_layers - 1)
        dims_in = [input_dim] + h
        dims_out = h + [output_dim]

        # Common lane-dense width (multiple of 128) covering every layer dim.
        dmax = _round_up(max([input_dim] + h + [output_dim]), 128)
        self.dmax = dmax

        self.raw_params = []  # unpadded (w, b); PyTorch layout transposed to (in, out)
        w_pads, b_pads = [], []
        for n_in, n_out in zip(dims_in, dims_out):
            key, kw, kb = jax.random.split(key, 3)
            # Matches nn.Linear's uniform(-1/sqrt(in), 1/sqrt(in)) init.
            bound = 1.0 / (n_in ** 0.5)
            w = jax.random.uniform(kw, (n_in, n_out), jnp.float32, -bound, bound)
            b = jax.random.uniform(kb, (n_out,), jnp.float32, -bound, bound)
            self.raw_params.append((w, b))
            w_pads.append(jnp.zeros((dmax, dmax), jnp.float32).at[:n_in, :n_out].set(w))
            b_pads.append(jnp.zeros((1, dmax), jnp.float32).at[0, :n_out].set(b))

        self.w_stack = jnp.stack(w_pads)  # (L, Dmax, Dmax)
        self.b_stack = jnp.stack(b_pads)  # (L, 1, Dmax)

    def __call__(self, x):
        return _mlp_apply(
            x, self.w_stack, self.b_stack,
            num_layers=self.num_layers, out_dim=self.output_dim,
            token_tile=self.token_tile,
        )


if __name__ == "__main__":
    key = jax.random.PRNGKey(0)
    k_in, k_params = jax.random.split(key)

    batch, seq = 2, 8
    input_dim, hidden_dim, output_dim, num_layers = 16, 32, 8, 3

    x = jax.random.normal(k_in, (batch, seq, input_dim), jnp.float32)
    mlp = MLP(input_dim, hidden_dim, output_dim, num_layers, k_params)

    out = mlp(x)
    jax.block_until_ready(out)

    # Pure-JAX reference (unpadded params).
    ref = x.reshape(-1, input_dim)
    for i, (w, b) in enumerate(mlp.raw_params):
        ref = ref @ w + b
        if i < num_layers - 1:
            ref = jnp.maximum(ref, 0.0)
    ref = ref.reshape(batch, seq, output_dim)

    assert out.shape == (batch, seq, output_dim)
    assert jnp.allclose(out, ref, atol=1e-5, rtol=1e-5)

    print("KERNEL_OK")
</pallas_src>

<mosaic_0001>
module attributes {stable_mosaic.version = 11 : i64} {
  func.func @_fused_mlp_kernel(%arg0: i32, %arg1: memref<16x128xf32, #tpu.memory_space<vmem>>, %arg2: memref<3x128x128xf32, #tpu.memory_space<vmem>>, %arg3: memref<3x1x128xf32, #tpu.memory_space<vmem>>, %arg4: memref<16x128xf32, #tpu.memory_space<vmem>>) attributes {dimension_semantics = [#tpu.dimension_semantics<parallel>], iteration_bounds = array<i64: 1>, scalar_prefetch = 0 : i64, scratch_operands = 0 : i64, tpu.core_type = #tpu.core_type<tc>, window_params = [{transform_indices = @transform_0, window_bounds = array<i64: 16, 128>}, {pipeline_mode = #tpu.pipeline_mode<synchronous>, transform_indices = @transform_1, window_bounds = array<i64: 3, 128, 128>}, {pipeline_mode = #tpu.pipeline_mode<synchronous>, transform_indices = @transform_2, window_bounds = array<i64: 3, 1, 128>}, {transform_indices = @transform_3, window_bounds = array<i64: 16, 128>}]} {
    %c0 = arith.constant 0 : index
    %c0_0 = arith.constant 0 : index
    %0 = vector.load %arg1[%c0, %c0_0] : memref<16x128xf32, #tpu.memory_space<vmem>>, vector<16x128xf32>
    %c0_1 = arith.constant 0 : index
    %c0_2 = arith.constant 0 : index
    %c0_3 = arith.constant 0 : index
    %1 = vector.load %arg2[%c0_1, %c0_2, %c0_3] : memref<3x128x128xf32, #tpu.memory_space<vmem>>, vector<1x128x128xf32>
    %2 = vector.shape_cast %1 : vector<1x128x128xf32> to vector<128x128xf32>
    %cst = arith.constant dense<0.000000e+00> : vector<16x128xf32>
    %3 = tpu.matmul %0, %2, %cst {dimension_numbers = #tpu.dot_dimension_numbers<[1], [0], [0], [1], [0, 0, 1, 1], [], []>} : vector<16x128xf32>, vector<128x128xf32>, vector<16x128xf32> -> vector<16x128xf32>
    %c0_4 = arith.constant 0 : index
    %c0_5 = arith.constant 0 : index
    %c0_6 = arith.constant 0 : index
    %4 = vector.load %arg3[%c0_4, %c0_5, %c0_6] : memref<3x1x128xf32, #tpu.memory_space<vmem>>, vector<1x1x128xf32>
    %5 = vector.shape_cast %4 : vector<1x1x128xf32> to vector<1x128xf32>
    %6 = vector.broadcast %5 : vector<1x128xf32> to vector<16x128xf32>
    %7 = arith.addf %3, %6 : vector<16x128xf32>
    %cst_7 = arith.constant 0.000000e+00 : f32
    %8 = vector.broadcast %cst_7 : f32 to vector<16x128xf32>
    %9 = arith.maximumf %7, %8 : vector<16x128xf32>
    %c1 = arith.constant 1 : index
    %c0_8 = arith.constant 0 : index
    %c0_9 = arith.constant 0 : index
    %10 = vector.load %arg2[%c1, %c0_8, %c0_9] : memref<3x128x128xf32, #tpu.memory_space<vmem>>, vector<1x128x128xf32>
    %11 = vector.shape_cast %10 : vector<1x128x128xf32> to vector<128x128xf32>
    %cst_10 = arith.constant dense<0.000000e+00> : vector<16x128xf32>
    %12 = tpu.matmul %9, %11, %cst_10 {dimension_numbers = #tpu.dot_dimension_numbers<[1], [0], [0], [1], [0, 0, 1, 1], [], []>} : vector<16x128xf32>, vector<128x128xf32>, vector<16x128xf32> -> vector<16x128xf32>
    %c1_11 = arith.constant 1 : index
    %c0_12 = arith.constant 0 : index
    %c0_13 = arith.constant 0 : index
    %13 = vector.load %arg3[%c1_11, %c0_12, %c0_13] : memref<3x1x128xf32, #tpu.memory_space<vmem>>, vector<1x1x128xf32>
    %14 = vector.shape_cast %13 : vector<1x1x128xf32> to vector<1x128xf32>
    %15 = vector.broadcast %14 : vector<1x128xf32> to vector<16x128xf32>
    %16 = arith.addf %12, %15 : vector<16x128xf32>
    %cst_14 = arith.constant 0.000000e+00 : f32
    %17 = vector.broadcast %cst_14 : f32 to vector<16x128xf32>
    %18 = arith.maximumf %16, %17 : vector<16x128xf32>
    %c2 = arith.constant 2 : index
    %c0_15 = arith.constant 0 : index
    %c0_16 = arith.constant 0 : index
    %19 = vector.load %arg2[%c2, %c0_15, %c0_16] : memref<3x128x128xf32, #tpu.memory_space<vmem>>, vector<1x128x128xf32>
    %20 = vector.shape_cast %19 : vector<1x128x128xf32> to vector<128x128xf32>
    %cst_17 = arith.constant dense<0.000000e+00> : vector<16x128xf32>
    %21 = tpu.matmul %18, %20, %cst_17 {dimension_numbers = #tpu.dot_dimension_numbers<[1], [0], [0], [1], [0, 0, 1, 1], [], []>} : vector<16x128xf32>, vector<128x128xf32>, vector<16x128xf32> -> vector<16x128xf32>
    %c2_18 = arith.constant 2 : index
    %c0_19 = arith.constant 0 : index
    %c0_20 = arith.constant 0 : index
    %22 = vector.load %arg3[%c2_18, %c0_19, %c0_20] : memref<3x1x128xf32, #tpu.memory_space<vmem>>, vector<1x1x128xf32>
    %23 = vector.shape_cast %22 : vector<1x1x128xf32> to vector<1x128xf32>
    %24 = vector.broadcast %23 : vector<1x128xf32> to vector<16x128xf32>
    %25 = arith.addf %21, %24 : vector<16x128xf32>
    %c0_21 = arith.constant 0 : index
    %c0_22 = arith.constant 0 : index
    %26 = vector.load %arg4[%c0_21, %c0_22] : memref<16x128xf32, #tpu.memory_space<vmem>>, vector<16x128xf32>
    tpu.vector_store %arg4[%c0_21, %c0_22], %25 {strides = array<i32>} : memref<16x128xf32, #tpu.memory_space<vmem>>, vector<16x128xf32>,
    return
  }
  func.func @transform_0(%arg0: i32) -> (i32, i32) {
    %c0_i32 = arith.constant 0 : i32
    %c0_i32_0 = arith.constant 0 : i32
    return %arg0, %c0_i32 : i32, i32
  }
  func.func @transform_1(%arg0: i32) -> (i32, i32, i32) {
    %c0_i32 = arith.constant 0 : i32
    %c0_i32_0 = arith.constant 0 : i32
    %c0_i32_1 = arith.constant 0 : i32
    %c0_i32_2 = arith.constant 0 : i32
    return %c0_i32, %c0_i32_0, %c0_i32_1 : i32, i32, i32
  }
  func.func @transform_2(%arg0: i32) -> (i32, i32, i32) {
    %c0_i32 = arith.constant 0 : i32
    %c0_i32_0 = arith.constant 0 : i32
    %c0_i32_1 = arith.constant 0 : i32
    %c0_i32_2 = arith.constant 0 : i32
    return %c0_i32, %c0_i32_0, %c0_i32_1 : i32, i32, i32
  }
  func.func @transform_3(%arg0: i32) -> (i32, i32) {
    %c0_i32 = arith.constant 0 : i32
    %c0_i32_0 = arith.constant 0 : i32
    return %arg0, %c0_i32 : i32, i32
  }
}

</mosaic_0001>

<llo_original>
// kernel: _mlp_apply.1
$region0: #{_mlp_apply.1}
  #allocation0 [shape = 'u32[]', space=smem, size = 0x4, offset = 0x4, fixed_abs, tag = 'smem constant byte address 0x4 - core index']
  #allocation1 [shape = 'u32[144,128]{1,0:T(1,128)}', space=vmem, size = 0x12000, scoped, tag = 'internal scratch']
  %s0 = inlined_call_operand.vmem [shape: f32[16,128], index: 0, kind: input, shape index: {}]
  %s1 = inlined_call_operand.hbm [shape: f32[3,128,128], index: 1, kind: input, shape index: {}]
  %s2 = inlined_call_operand.vmem [shape: f32[3,1,128], index: 2, kind: input, shape index: {}]
  %s3 = inlined_call_operand.vmem [shape: f32[16,128], index: 3, kind: output, shape index: {}]
  %s4 = sld [smem:[#allocation0]]
  $region26: #{_mlp_apply.1} parent=0
    _
  %s6 = ssub.s32 1, %s4
  %s7 = scalar_select 0, %s6, %s4
  $region1: #{_mlp_apply.1} parent=0
    #allocation2 [shape = 'u8[196608]{0}', space=vmem, size = 0x30000, scoped, tag = 'input window, operand 1, single buffered']
    #allocation3 [shape = 's32[1]{0}', space=sflag, size = 0x4, scoped, tag = 'scoped memory for _mlp_apply.1']
    %8 = vsyncpa [#allocation3], 0
    // Predicated region
    $region2: #{_mlp_apply.1} parent=1 // pred_check
      _
    $region3: #{_mlp_apply.1} parent=1 // pred_check_branch
      %10 = sbr.rel (0) target = $region5
    $region4: #{_mlp_apply.1} parent=1 // pred_region
      _
    $region5: #{_mlp_apply.1} parent=1 // pred_fallthru
      _
    // Predicated region
    $region6: #{_mlp_apply.1} parent=1 // pred_check
      _
    $region7: #{_mlp_apply.1} parent=1 // pred_check_branch
      %12 = sbr.rel (0) target = $region9
    $region8: #{_mlp_apply.1} parent=1 // pred_region
      %s14 = ssub.s32 6144, 6144
      %15 = vsyncadd [#allocation3], %s14
      %s16 = sshll.u32 [#allocation2], 4
      %s17 = int_to_ptr.vmem [resolvable:$true] %s16
      %22 = dma.hbm_to_vmem [thread:$0]  %s1, 6144, %s17, [#allocation3], 128, 128, 8
    $region9: #{_mlp_apply.1} parent=1 // pred_fallthru
      _
    // Predicated region
    $region10: #{_mlp_apply.1} parent=1 // pred_check
      _
    $region11: #{_mlp_apply.1} parent=1 // pred_check_branch
      %24 = sbr.rel (0) target = $region13
    $region12: #{_mlp_apply.1} parent=1 // pred_region
      _
    $region13: #{_mlp_apply.1} parent=1 // pred_fallthru
      _
    // Predicated region
    $region14: #{_mlp_apply.1} parent=1 // pred_check
      _
    $region15: #{_mlp_apply.1} parent=1 // pred_check_branch
      %26 = sbr.rel (0) target = $region17
    $region16: #{_mlp_apply.1} parent=1 // pred_region
      %27 = dma.done [#allocation3], 6144
    $region17: #{_mlp_apply.1} parent=1 // pred_fallthru
      _
    %v28 = vld [vmem:[%s0] sm:$0xff]
    %v29 = vld [vmem:[%s0 + $0x8] sm:$0xff]
    %v30 = vld [vmem:[#allocation2] sm:$0xff]
    %v31 = vld [vmem:[#allocation2 + $0x8] sm:$0xff]
    %v32 = vld [vmem:[#allocation2 + $0x10] sm:$0xff]
    %v33 = vld [vmem:[#allocation2 + $0x18] sm:$0xff]
    %v34 = vld [vmem:[#allocation2 + $0x20] sm:$0xff]
    %v35 = vld [vmem:[#allocation2 + $0x28] sm:$0xff]
    %v36 = vld [vmem:[#allocation2 + $0x30] sm:$0xff]
    %v37 = vld [vmem:[#allocation2 + $0x38] sm:$0xff]
    %v38 = vld [vmem:[#allocation2 + $0x40] sm:$0xff]
    %v39 = vld [vmem:[#allocation2 + $0x48] sm:$0xff]
    %v40 = vld [vmem:[#allocation2 + $0x50] sm:$0xff]
    %v41 = vld [vmem:[#allocation2 + $0x58] sm:$0xff]
    %v42 = vld [vmem:[#allocation2 + $0x60] sm:$0xff]
    %v43 = vld [vmem:[#allocation2 + $0x68] sm:$0xff]
    %v44 = vld [vmem:[#allocation2 + $0x70] sm:$0xff]
    %v45 = vld [vmem:[#allocation2 + $0x78] sm:$0xff]
    %v46 = vld [vmem:[%s2] sm:$0x1]
    %v48 = vlaneseq
    %v49 = vshrl.u32 %v48, 7
    %v50 = vsub.s32 0, %v49
    %v51 = vrot.slane %v46, %v50
    %53 = vmatprep.subr.mxu0 0.0
    %54 = vmatpush1.msra.mxu0 %v30
    %55 = vmatprep.subr.mxu0 0.0
    %56 = vmatpush1.msra.mxu0 %v31
    %57 = vmatprep.subr.mxu0 0.0
    %58 = vmatpush1.msra.mxu0 %v32
    %59 = vmatprep.subr.mxu0 0.0
    %60 = vmatpush1.msra.mxu0 %v33
    %61 = vmatprep.subr.mxu0 0.0
    %62 = vmatpush1.msra.mxu0 %v34
    %63 = vmatprep.subr.mxu0 0.0
    %64 = vmatpush1.msra.mxu0 %v35
    %65 = vmatprep.subr.mxu0 0.0
    %66 = vmatpush1.msra.mxu0 %v36
    %67 = vmatprep.subr.mxu0 0.0
    %68 = vmatpush1.msra.mxu0 %v37
    %69 = vmatprep.subr.mxu0 0.0
    %70 = vmatpush1.msra.mxu0 %v38
    %71 = vmatprep.subr.mxu0 0.0
    %72 = vmatpush1.msra.mxu0 %v39
    %73 = vmatprep.subr.mxu0 0.0
    %74 = vmatpush1.msra.mxu0 %v40
    %75 = vmatprep.subr.mxu0 0.0
    %76 = vmatpush1.msra.mxu0 %v41
    %77 = vmatprep.subr.mxu0 0.0
    %78 = vmatpush1.msra.mxu0 %v42
    %79 = vmatprep.subr.mxu0 0.0
    %80 = vmatpush1.msra.mxu0 %v43
    %81 = vmatprep.subr.mxu0 0.0
    %82 = vmatpush1.msra.mxu0 %v44
    %83 = vmatprep.subr.mxu0 0.0
    %84 = vmatpush1.msra.mxu0 %v45
    %85 = vmatprep.subr.mxu0 0.0
    %86 = vmatpush1.msra.mxu0 0.0
    %87 = vmatprep.subr.mxu0 0.0
    %88 = vmatpush1.msra.mxu0 0.0
    %89 = vmatprep.subr.mxu0 0.0
    %90 = vmatpush1.msra.mxu0 0.0
    %91 = vmatprep.subr.mxu0 0.0
    %92 = vmatpush1.msra.mxu0 0.0
    %93 = vmatprep.subr.mxu0 0.0
    %94 = vmatpush1.msra.mxu0 0.0
    %95 = vmatprep.subr.mxu0 0.0
    %96 = vmatpush1.msra.mxu0 0.0
    %97 = vmatprep.subr.mxu0 0.0
    %98 = vmatpush1.msra.mxu0 0.0
    %99 = vmatprep.subr.mxu0 0.0
    %100 = vmatpush1.msra.mxu0 0.0
    %101 = vmatprep.subr.mxu0 0.0
    %102 = vmatpush1.msra.mxu0 0.0
    %103 = vmatprep.subr.mxu0 0.0
    %104 = vmatpush1.msra.mxu0 0.0
    %105 = vmatprep.subr.mxu0 0.0
    %106 = vmatpush1.msra.mxu0 0.0
    %107 = vmatprep.subr.mxu0 0.0
    %108 = vmatpush1.msra.mxu0 0.0
    %109 = vmatprep.subr.mxu0 0.0
    %110 = vmatpush1.msra.mxu0 0.0
    %111 = vmatprep.subr.mxu0 0.0
    %112 = vmatpush1.msra.mxu0 0.0
    %113 = vmatprep.subr.mxu0 0.0
    %114 = vmatpush1.msra.mxu0 0.0
    %115 = vmatprep.subr.mxu0 0.0
    %116 = vmatpush1.msra.mxu0 0.0
    %117 = vmatprep.mubr.f32.mxu0 0.0
    %118 = vmatmul.mubr.f32.gmra.mrb[0].mxu0 %v28
    %v119 = vpop.f32.mrb[0].mxu0
    %v120 = vadd.f32 %v51, %v119
    %v121 = vpop.f32.mrb[0].mxu0
    %122 = vmatprep.mubr.f32.mxu0 0.0
    %123 = vmatmul.mubr.f32.gmra.mrb[0].mxu0 %v29
    %v124 = vpop.f32.mrb[0].mxu0
    %v125 = vadd.f32 %v51, %v124
    %v126 = vpop.f32.mrb[0].mxu0
    %127 = vdwg.mxu0
    %v128 = vmax.f32 %v120, 0.0
    %v129 = vmax.f32 %v125, 0.0
    %s130 = scalar_lea.vmem [#allocation2], 128
    %v131 = vld [vmem:[%s130] sm:$0xff]
    %v132 = vld [vmem:[%s130 + $0x8] sm:$0xff]
    %v133 = vld [vmem:[%s130 + $0x10] sm:$0xff]
    %v134 = vld [vmem:[%s130 + $0x18] sm:$0xff]
    %v135 = vld [vmem:[%s130 + $0x20] sm:$0xff]
    %v136 = vld [vmem:[%s130 + $0x28] sm:$0xff]
    %v137 = vld [vmem:[%s130 + $0x30] sm:$0xff]
    %v138 = vld [vmem:[%s130 + $0x38] sm:$0xff]
    %v139 = vld [vmem:[%s130 + $0x40] sm:$0xff]
    %v140 = vld [vmem:[%s130 + $0x48] sm:$0xff]
    %v141 = vld [vmem:[%s130 + $0x50] sm:$0xff]
    %v142 = vld [vmem:[%s130 + $0x58] sm:$0xff]
    %v143 = vld [vmem:[%s130 + $0x60] sm:$0xff]
    %v144 = vld [vmem:[%s130 + $0x68] sm:$0xff]
    %v145 = vld [vmem:[%s130 + $0x70] sm:$0xff]
    %v146 = vld [vmem:[%s130 + $0x78] sm:$0xff]
    %s147 = scalar_lea.vmem %s2, 1
    %v148 = vld [vmem:[%s147] sm:$0x1]
    %v150 = vlaneseq
    %v151 = vshrl.u32 %v150, 7
    %v152 = vsub.s32 0, %v151
    %v153 = vrot.slane %v148, %v152
    %155 = vmatprep.subr.mxu0 0.0
    %156 = vmatpush1.msra.mxu0 %v131
    %157 = vmatprep.subr.mxu0 0.0
    %158 = vmatpush1.msra.mxu0 %v132
    %159 = vmatprep.subr.mxu0 0.0
    %160 = vmatpush1.msra.mxu0 %v133
    %161 = vmatprep.subr.mxu0 0.0
    %162 = vmatpush1.msra.mxu0 %v134
    %163 = vmatprep.subr.mxu0 0.0
    %164 = vmatpush1.msra.mxu0 %v135
    %165 = vmatprep.subr.mxu0 0.0
    %166 = vmatpush1.msra.mxu0 %v136
    %167 = vmatprep.subr.mxu0 0.0
    %168 = vmatpush1.msra.mxu0 %v137
    %169 = vmatprep.subr.mxu0 0.0
    %170 = vmatpush1.msra.mxu0 %v138
    %171 = vmatprep.subr.mxu0 0.0
    %172 = vmatpush1.msra.mxu0 %v139
    %173 = vmatprep.subr.mxu0 0.0
    %174 = vmatpush1.msra.mxu0 %v140
    %175 = vmatprep.subr.mxu0 0.0
    %176 = vmatpush1.msra.mxu0 %v141
    %177 = vmatprep.subr.mxu0 0.0
    %178 = vmatpush1.msra.mxu0 %v142
    %179 = vmatprep.subr.mxu0 0.0
    %180 = vmatpush1.msra.mxu0 %v143
    %181 = vmatprep.subr.mxu0 0.0
    %182 = vmatpush1.msra.mxu0 %v144
    %183 = vmatprep.subr.mxu0 0.0
    %184 = vmatpush1.msra.mxu0 %v145
    %185 = vmatprep.subr.mxu0 0.0
    %186 = vmatpush1.msra.mxu0 %v146
    %187 = vmatprep.subr.mxu0 0.0
    %188 = vmatpush1.msra.mxu0 0.0
    %189 = vmatprep.subr.mxu0 0.0
    %190 = vmatpush1.msra.mxu0 0.0
    %191 = vmatprep.subr.mxu0 0.0
    %192 = vmatpush1.msra.mxu0 0.0
    %193 = vmatprep.subr.mxu0 0.0
    %194 = vmatpush1.msra.mxu0 0.0
    %195 = vmatprep.subr.mxu0 0.0
    %196 = vmatpush1.msra.mxu0 0.0
    %197 = vmatprep.subr.mxu0 0.0
    %198 = vmatpush1.msra.mxu0 0.0
    %199 = vmatprep.subr.mxu0 0.0
    %200 = vmatpush1.msra.mxu0 0.0
    %201 = vmatprep.subr.mxu0 0.0
    %202 = vmatpush1.msra.mxu0 0.0
    %203 = vmatprep.subr.mxu0 0.0
    %204 = vmatpush1.msra.mxu0 0.0
    %205 = vmatprep.subr.mxu0 0.0
    %206 = vmatpush1.msra.mxu0 0.0
    %207 = vmatprep.subr.mxu0 0.0
    %208 = vmatpush1.msra.mxu0 0.0
    %209 = vmatprep.subr.mxu0 0.0
    %210 = vmatpush1.msra.mxu0 0.0
    %211 = vmatprep.subr.mxu0 0.0
    %212 = vmatpush1.msra.mxu0 0.0
    %213 = vmatprep.subr.mxu0 0.0
    %214 = vmatpush1.msra.mxu0 0.0
    %215 = vmatprep.subr.mxu0 0.0
    %216 = vmatpush1.msra.mxu0 0.0
    %217 = vmatprep.subr.mxu0 0.0
    %218 = vmatpush1.msra.mxu0 0.0
    %219 = vmatprep.mubr.f32.mxu0 0.0
    %220 = vmatmul.mubr.f32.gmra.mrb[0].mxu0 %v128
    %v221 = vpop.f32.mrb[0].mxu0
    %v222 = vadd.f32 %v153, %v221
    %v223 = vpop.f32.mrb[0].mxu0
    %224 = vmatprep.mubr.f32.mxu0 0.0
    %225 = vmatmul.mubr.f32.gmra.mrb[0].mxu0 %v129
    %v226 = vpop.f32.mrb[0].mxu0
    %v227 = vadd.f32 %v153, %v226
    %v228 = vpop.f32.mrb[0].mxu0
    %229 = vdwg.mxu0
    %v230 = vmax.f32 %v222, 0.0
    %v231 = vmax.f32 %v227, 0.0
    %s232 = scalar_lea.vmem [#allocation2], 256
    %v233 = vld [vmem:[%s232] sm:$0xff]
    %v234 = vld [vmem:[%s232 + $0x8] sm:$0xff]
    %v235 = vld [vmem:[%s232 + $0x10] sm:$0xff]
    %v236 = vld [vmem:[%s232 + $0x18] sm:$0xff]
    %v237 = vld [vmem:[%s232 + $0x20] sm:$0xff]
    %v238 = vld [vmem:[%s232 + $0x28] sm:$0xff]
    %v239 = vld [vmem:[%s232 + $0x30] sm:$0xff]
    %v240 = vld [vmem:[%s232 + $0x38] sm:$0xff]
    %v241 = vld [vmem:[%s232 + $0x40] sm:$0xff]
    %v242 = vld [vmem:[%s232 + $0x48] sm:$0xff]
    %v243 = vld [vmem:[%s232 + $0x50] sm:$0xff]
    %v244 = vld [vmem:[%s232 + $0x58] sm:$0xff]
    %v245 = vld [vmem:[%s232 + $0x60] sm:$0xff]
    %v246 = vld [vmem:[%s232 + $0x68] sm:$0xff]
    %v247 = vld [vmem:[%s232 + $0x70] sm:$0xff]
    %v248 = vld [vmem:[%s232 + $0x78] sm:$0xff]
    %s249 = scalar_lea.vmem %s2, 2
    %v250 = vld [vmem:[%s249] sm:$0x1]
    %v252 = vlaneseq
    %v253 = vshrl.u32 %v252, 7
    %v254 = vsub.s32 0, %v253
    %v255 = vrot.slane %v250, %v254
    %257 = vmatprep.subr.mxu0 0.0
    %258 = vmatpush1.msra.mxu0 %v233
    %259 = vmatprep.subr.mxu0 0.0
    %260 = vmatpush1.msra.mxu0 %v234
    %261 = vmatprep.subr.mxu0 0.0
    %262 = vmatpush1.msra.mxu0 %v235
    %263 = vmatprep.subr.mxu0 0.0
    %264 = vmatpush1.msra.mxu0 %v236
    %265 = vmatprep.subr.mxu0 0.0
    %266 = vmatpush1.msra.mxu0 %v237
    %267 = vmatprep.subr.mxu0 0.0
    %268 = vmatpush1.msra.mxu0 %v238
    %269 = vmatprep.subr.mxu0 0.0
    %270 = vmatpush1.msra.mxu0 %v239
    %271 = vmatprep.subr.mxu0 0.0
    %272 = vmatpush1.msra.mxu0 %v240
    %273 = vmatprep.subr.mxu0 0.0
    %274 = vmatpush1.msra.mxu0 %v241
    %275 = vmatprep.subr.mxu0 0.0
    %276 = vmatpush1.msra.mxu0 %v242
    %277 = vmatprep.subr.mxu0 0.0
    %278 = vmatpush1.msra.mxu0 %v243
    %279 = vmatprep.subr.mxu0 0.0
    %280 = vmatpush1.msra.mxu0 %v244
    %281 = vmatprep.subr.mxu0 0.0
    %282 = vmatpush1.msra.mxu0 %v245
    %283 = vmatprep.subr.mxu0 0.0
    %284 = vmatpush1.msra.mxu0 %v246
    %285 = vmatprep.subr.mxu0 0.0
    %286 = vmatpush1.msra.mxu0 %v247
    %287 = vmatprep.subr.mxu0 0.0
    %288 = vmatpush1.msra.mxu0 %v248
    %289 = vmatprep.subr.mxu0 0.0
    %290 = vmatpush1.msra.mxu0 0.0
    %291 = vmatprep.subr.mxu0 0.0
    %292 = vmatpush1.msra.mxu0 0.0
    %293 = vmatprep.subr.mxu0 0.0
    %294 = vmatpush1.msra.mxu0 0.0
    %295 = vmatprep.subr.mxu0 0.0
    %296 = vmatpush1.msra.mxu0 0.0
    %297 = vmatprep.subr.mxu0 0.0
    %298 = vmatpush1.msra.mxu0 0.0
    %299 = vmatprep.subr.mxu0 0.0
    %300 = vmatpush1.msra.mxu0 0.0
    %301 = vmatprep.subr.mxu0 0.0
    %302 = vmatpush1.msra.mxu0 0.0
    %303 = vmatprep.subr.mxu0 0.0
    %304 = vmatpush1.msra.mxu0 0.0
    %305 = vmatprep.subr.mxu0 0.0
    %306 = vmatpush1.msra.mxu0 0.0
    %307 = vmatprep.subr.mxu0 0.0
    %308 = vmatpush1.msra.mxu0 0.0
    %309 = vmatprep.subr.mxu0 0.0
    %310 = vmatpush1.msra.mxu0 0.0
    %311 = vmatprep.subr.mxu0 0.0
    %312 = vmatpush1.msra.mxu0 0.0
    %313 = vmatprep.subr.mxu0 0.0
    %314 = vmatpush1.msra.mxu0 0.0
    %315 = vmatprep.subr.mxu0 0.0
    %316 = vmatpush1.msra.mxu0 0.0
    %317 = vmatprep.subr.mxu0 0.0
    %318 = vmatpush1.msra.mxu0 0.0
    %319 = vmatprep.subr.mxu0 0.0
    %320 = vmatpush1.msra.mxu0 0.0
    %321 = vmatprep.mubr.f32.mxu0 0.0
    %322 = vmatmul.mubr.f32.gmra.mrb[0].mxu0 %v230
    %v323 = vpop.f32.mrb[0].mxu0
    %v324 = vadd.f32 %v255, %v323
    %v325 = vpop.f32.mrb[0].mxu0
    %326 = vmatprep.mubr.f32.mxu0 0.0
    %327 = vmatmul.mubr.f32.gmra.mrb[0].mxu0 %v231
    %v328 = vpop.f32.mrb[0].mxu0
    %v329 = vadd.f32 %v255, %v328
    %v330 = vpop.f32.mrb[0].mxu0
    %331 = vdwg.mxu0
    %332 = vst [vmem:[%s3] sm:$0xff] %v324
    %333 = vst [vmem:[%s3 + $0x8] sm:$0xff] %v329
    // Predicated region
    $region18: #{_mlp_apply.1} parent=1 // pred_check
      _
    $region19: #{_mlp_apply.1} parent=1 // pred_check_branch
      %335 = sbr.rel (0) target = $region21
    $region20: #{_mlp_apply.1} parent=1 // pred_region
      _
    $region21: #{_mlp_apply.1} parent=1 // pred_fallthru
      _
    // Predicated region
    $region22: #{_mlp_apply.1} parent=1 // pred_check
      _
    $region23: #{_mlp_apply.1} parent=1 // pred_check_branch
      %337 = sbr.rel (0) target = $region25
    $region24: #{_mlp_apply.1} parent=1 // pred_region
      _
    $region25: #{_mlp_apply.1} parent=1 // pred_fallthru
      _
    %338 = vsyncpa [#allocation3], 1

</llo_original>
